<compile_context>
chip_gen: v5e
topology: v5e:2x2
jax: 0.10.0
libtpu: 0.0.40
codegen_flags: <defaults>
</compile_context>

<pallas_src>
import functools

import jax
import jax.numpy as jnp
from jax import lax
from jax.experimental import pallas as pl
from jax.experimental.pallas import tpu as pltpu

EPS = 1e-5  # nn.InstanceNorm2d default eps (affine=False, no running stats)


def _make_taps(H, W):
    """Static lane-roll amount + host-side validity mask per 3x3 tap.

    Tap t = dy*3 + dx reads input pixel (y+dy-1, x+dx-1); expressed as a
    circular lane roll of the flattened (H*W) axis plus a 0/1 mask that
    implements the conv's zero padding (zeroes the wrapped values).
    """
    HW = H * W
    pos = jnp.arange(HW, dtype=jnp.int32)
    yy = pos // W
    xx = pos - yy * W

    deltas = []
    rows = []
    for dy in range(3):
        for dx in range(3):
            sy, sx = 1 - dy, 1 - dx              # shift applied to the input
            deltas.append((sy * W + sx) % HW)    # static python int
            m = jnp.ones((HW,), jnp.bool_)
            if sy == 1:
                m &= yy >= 1
            elif sy == -1:
                m &= yy < H - 1
            if sx == 1:
                m &= xx >= 1
            elif sx == -1:
                m &= xx < W - 1
            rows.append(m)
    masks = jnp.stack(rows, axis=0).astype(jnp.float32).reshape(9, 1, HW)
    return tuple(deltas), masks


def _residual_block_kernel(x_ref, w1_ref, b1_ref, w2_ref, b2_ref, m_ref,
                           o_ref, *, deltas, N, HW):
    # x_ref:  (N, Cp, HW)   whole batch, spatial flattened on lanes
    # w*_ref: (Cp, 9*Cp)    fused conv weights, column = tap*Cp + c_in
    # b*_ref: (Cp, 1)       conv biases
    # m_ref:  (9, 1, HW)    0/1 zero-padding masks (host precomputed)
    # o_ref:  (N, Cp, HW)
    inv_hw = 1.0 / float(HW)

    w1 = w1_ref[...]
    w2 = w2_ref[...]
    b1 = b1_ref[...]
    b2 = b2_ref[...]
    tap_masks = [m_ref[t] for t in range(9)]     # each (1, HW), loaded once

    def stacked_taps(y):                         # (Cp, HW) -> (9*Cp, HW)
        parts = []
        for t in range(9):
            if deltas[t]:
                s = pltpu.roll(y, deltas[t], axis=1)   # XLU, ~free slot
                s = s * tap_masks[t]                   # zero padding
            else:
                s = y                                  # center tap: no-op
            parts.append(s)
        return jnp.concatenate(parts, axis=0)

    def conv3x3(y, w, b):
        # single fused MXU matmul per conv, K = 9*Cp, N = HW
        return jnp.dot(w, stacked_taps(y), preferred_element_type=jnp.float32) + b

    def instance_norm(y):
        # single-pass per-channel stats over the lane (spatial) axis, biased var
        mean = jnp.sum(y, axis=1, keepdims=True) * inv_hw
        ex2 = jnp.sum(y * y, axis=1, keepdims=True) * inv_hw
        var = jnp.maximum(ex2 - mean * mean, 0.0)
        return (y - mean) * lax.rsqrt(var + EPS)

    # Whole batch in one grid step; N is small and static.
    for n in range(N):
        x = x_ref[n].astype(jnp.float32)         # (Cp, HW)
        h = jnp.maximum(instance_norm(conv3x3(x, w1, b1)), 0.0)
        h = instance_norm(conv3x3(h, w2, b2))
        o_ref[n] = (x + h).astype(o_ref.dtype)


def residual_block(x_nchw, w1_oihw, b1, w2_oihw, b2):
    """Pallas ResidualBlock forward. Takes/returns NCHW float32 like PyTorch."""
    N, C, H, W = x_nchw.shape
    HW = H * W
    Cp = ((C + 7) // 8) * 8                      # full sublane / MXU-row density

    deltas, masks = _make_taps(H, W)

    # Free reshape at the HBM boundary (no transposes); zero-pad channels.
    x2 = x_nchw.reshape(N, C, HW).astype(jnp.float32)
    if Cp != C:
        x2 = jnp.pad(x2, ((0, 0), (0, Cp - C), (0, 0)))

    def prep_w(w):  # OIHW -> fused (Cp, 9*Cp), column = (ky*3+kx)*Cp + c_in
        w = w.astype(jnp.float32)
        if Cp != C:
            w = jnp.pad(w, ((0, Cp - C), (0, Cp - C), (0, 0), (0, 0)))
        return jnp.transpose(w, (0, 2, 3, 1)).reshape(Cp, 9 * Cp)

    def prep_b(b):
        b = b.astype(jnp.float32)
        if Cp != C:
            b = jnp.pad(b, ((0, Cp - C),))
        return b.reshape(Cp, 1)

    w1f, w2f = prep_w(w1_oihw), prep_w(w2_oihw)
    b1r, b2r = prep_b(b1), prep_b(b2)

    kernel = functools.partial(_residual_block_kernel, deltas=deltas, N=N, HW=HW)

    # TODO(synk): for large images (e.g. 256x256 x C=64 style-transfer blocks),
    # add a row-strip grid axis with a 1-row halo, restructure InstanceNorm as
    # a two-pass (accumulate per-channel sum/sumsq across strips, then
    # normalize), set vmem_limit_bytes explicitly (v7x has 64 MiB VMEM, v5e a
    # 16 MiB default scoped limit), and cast dot operands to bf16 on v6e/v7x.
    out = pl.pallas_call(
        kernel,
        out_shape=jax.ShapeDtypeStruct((N, Cp, HW), jnp.float32),
        grid_spec=pltpu.PrefetchScalarGridSpec(
            num_scalar_prefetch=0,
            grid=(1,),                                           # one step: whole batch
            in_specs=[
                pl.BlockSpec((N, Cp, HW), lambda i: (0, 0, 0)),  # images (lane-dense)
                pl.BlockSpec((Cp, 9 * Cp), lambda i: (0, 0)),    # fused w1
                pl.BlockSpec((Cp, 1), lambda i: (0, 0)),         # b1
                pl.BlockSpec((Cp, 9 * Cp), lambda i: (0, 0)),    # fused w2
                pl.BlockSpec((Cp, 1), lambda i: (0, 0)),         # b2
                pl.BlockSpec((9, 1, HW), lambda i: (0, 0, 0)),   # padding masks
            ],
            out_specs=pl.BlockSpec((N, Cp, HW), lambda i: (0, 0, 0)),
        ),
        compiler_params=pltpu.CompilerParams(
            dimension_semantics=("arbitrary",)),   # singleton grid, no pipelining needed
    )(x2, w1f, b1r, w2f, b2r, masks)

    if Cp != C:
        out = out[:, :C, :]
    return out.reshape(N, C, H, W)


def _reference_forward(x, w1, b1, w2, b2):
    """Pure-JAX NCHW reference mirroring the PyTorch module."""
    def conv(h, w, b):
        y = lax.conv_general_dilated(
            h, w, window_strides=(1, 1), padding="SAME",
            dimension_numbers=("NCHW", "OIHW", "NCHW"))
        return y + b.reshape(1, -1, 1, 1)

    def inorm(y):
        m = jnp.mean(y, axis=(2, 3), keepdims=True)
        v = jnp.mean((y - m) ** 2, axis=(2, 3), keepdims=True)
        return (y - m) * lax.rsqrt(v + EPS)

    h = jnp.maximum(inorm(conv(x, w1, b1)), 0.0)
    h = inorm(conv(h, w2, b2))
    return x + h


if __name__ == "__main__":
    key = jax.random.PRNGKey(0)
    k_x, k_w1, k_b1, k_w2, k_b2 = jax.random.split(key, 5)

    N, C, H, W = 2, 4, 16, 16
    x = jax.random.normal(k_x, (N, C, H, W), dtype=jnp.float32)

    # Deterministic synthetic parameters (shapes per nn.Conv2d(C, C, 3, padding=1)).
    w1 = 0.1 * jax.random.normal(k_w1, (C, C, 3, 3), dtype=jnp.float32)
    b1 = 0.05 * jax.random.normal(k_b1, (C,), dtype=jnp.float32)
    w2 = 0.1 * jax.random.normal(k_w2, (C, C, 3, 3), dtype=jnp.float32)
    b2 = 0.05 * jax.random.normal(k_b2, (C,), dtype=jnp.float32)

    out = residual_block(x, w1, b1, w2, b2)
    out = jax.block_until_ready(out)

    ref = jax.block_until_ready(_reference_forward(x, w1, b1, w2, b2))
    assert out.shape == (N, C, H, W)
    assert jnp.allclose(out, ref, atol=2e-4, rtol=2e-4)

    print("KERNEL_OK")
</pallas_src>

<mosaic_0001>
module attributes {stable_mosaic.version = 11 : i64} {
  func.func @_residual_block_kernel(%arg0: i32, %arg1: memref<2x8x256xf32, #tpu.memory_space<vmem>>, %arg2: memref<8x72xf32, #tpu.memory_space<vmem>>, %arg3: memref<8x1xf32, #tpu.memory_space<vmem>>, %arg4: memref<8x72xf32, #tpu.memory_space<vmem>>, %arg5: memref<8x1xf32, #tpu.memory_space<vmem>>, %arg6: memref<9x1x256xf32, #tpu.memory_space<vmem>>, %arg7: memref<2x8x256xf32, #tpu.memory_space<vmem>>) attributes {dimension_semantics = [#tpu.dimension_semantics<arbitrary>], iteration_bounds = array<i64: 1>, scalar_prefetch = 0 : i64, scratch_operands = 0 : i64, tpu.core_type = #tpu.core_type<tc>, window_params = [{pipeline_mode = #tpu.pipeline_mode<synchronous>, transform_indices = @transform_0, window_bounds = array<i64: 2, 8, 256>}, {pipeline_mode = #tpu.pipeline_mode<synchronous>, transform_indices = @transform_1, window_bounds = array<i64: 8, 72>}, {pipeline_mode = #tpu.pipeline_mode<synchronous>, transform_indices = @transform_2, window_bounds = array<i64: 8, 1>}, {pipeline_mode = #tpu.pipeline_mode<synchronous>, transform_indices = @transform_3, window_bounds = array<i64: 8, 72>}, {pipeline_mode = #tpu.pipeline_mode<synchronous>, transform_indices = @transform_4, window_bounds = array<i64: 8, 1>}, {pipeline_mode = #tpu.pipeline_mode<synchronous>, transform_indices = @transform_5, window_bounds = array<i64: 9, 1, 256>}, {pipeline_mode = #tpu.pipeline_mode<synchronous>, transform_indices = @transform_6, window_bounds = array<i64: 2, 8, 256>}]} {
    %c0 = arith.constant 0 : index
    %c0_0 = arith.constant 0 : index
    %0 = vector.load %arg2[%c0, %c0_0] : memref<8x72xf32, #tpu.memory_space<vmem>>, vector<8x72xf32>
    %c0_1 = arith.constant 0 : index
    %c0_2 = arith.constant 0 : index
    %1 = vector.load %arg4[%c0_1, %c0_2] : memref<8x72xf32, #tpu.memory_space<vmem>>, vector<8x72xf32>
    %c0_3 = arith.constant 0 : index
    %c0_4 = arith.constant 0 : index
    %2 = vector.load %arg3[%c0_3, %c0_4] : memref<8x1xf32, #tpu.memory_space<vmem>>, vector<8x1xf32>
    %c0_5 = arith.constant 0 : index
    %c0_6 = arith.constant 0 : index
    %3 = vector.load %arg5[%c0_5, %c0_6] : memref<8x1xf32, #tpu.memory_space<vmem>>, vector<8x1xf32>
    %c0_7 = arith.constant 0 : index
    %c0_8 = arith.constant 0 : index
    %c0_9 = arith.constant 0 : index
    %4 = vector.load %arg6[%c0_7, %c0_8, %c0_9] : memref<9x1x256xf32, #tpu.memory_space<vmem>>, vector<1x1x256xf32>
    %5 = vector.shape_cast %4 : vector<1x1x256xf32> to vector<1x256xf32>
    %c1 = arith.constant 1 : index
    %c0_10 = arith.constant 0 : index
    %c0_11 = arith.constant 0 : index
    %6 = vector.load %arg6[%c1, %c0_10, %c0_11] : memref<9x1x256xf32, #tpu.memory_space<vmem>>, vector<1x1x256xf32>
    %7 = vector.shape_cast %6 : vector<1x1x256xf32> to vector<1x256xf32>
    %c2 = arith.constant 2 : index
    %c0_12 = arith.constant 0 : index
    %c0_13 = arith.constant 0 : index
    %8 = vector.load %arg6[%c2, %c0_12, %c0_13] : memref<9x1x256xf32, #tpu.memory_space<vmem>>, vector<1x1x256xf32>
    %9 = vector.shape_cast %8 : vector<1x1x256xf32> to vector<1x256xf32>
    %c3 = arith.constant 3 : index
    %c0_14 = arith.constant 0 : index
    %c0_15 = arith.constant 0 : index
    %10 = vector.load %arg6[%c3, %c0_14, %c0_15] : memref<9x1x256xf32, #tpu.memory_space<vmem>>, vector<1x1x256xf32>
    %11 = vector.shape_cast %10 : vector<1x1x256xf32> to vector<1x256xf32>
    %c5 = arith.constant 5 : index
    %c0_16 = arith.constant 0 : index
    %c0_17 = arith.constant 0 : index
    %12 = vector.load %arg6[%c5, %c0_16, %c0_17] : memref<9x1x256xf32, #tpu.memory_space<vmem>>, vector<1x1x256xf32>
    %13 = vector.shape_cast %12 : vector<1x1x256xf32> to vector<1x256xf32>
    %c6 = arith.constant 6 : index
    %c0_18 = arith.constant 0 : index
    %c0_19 = arith.constant 0 : index
    %14 = vector.load %arg6[%c6, %c0_18, %c0_19] : memref<9x1x256xf32, #tpu.memory_space<vmem>>, vector<1x1x256xf32>
    %15 = vector.shape_cast %14 : vector<1x1x256xf32> to vector<1x256xf32>
    %c7 = arith.constant 7 : index
    %c0_20 = arith.constant 0 : index
    %c0_21 = arith.constant 0 : index
    %16 = vector.load %arg6[%c7, %c0_20, %c0_21] : memref<9x1x256xf32, #tpu.memory_space<vmem>>, vector<1x1x256xf32>
    %17 = vector.shape_cast %16 : vector<1x1x256xf32> to vector<1x256xf32>
    %c8 = arith.constant 8 : index
    %c0_22 = arith.constant 0 : index
    %c0_23 = arith.constant 0 : index
    %18 = vector.load %arg6[%c8, %c0_22, %c0_23] : memref<9x1x256xf32, #tpu.memory_space<vmem>>, vector<1x1x256xf32>
    %19 = vector.shape_cast %18 : vector<1x1x256xf32> to vector<1x256xf32>
    %c0_24 = arith.constant 0 : index
    %c0_25 = arith.constant 0 : index
    %c0_26 = arith.constant 0 : index
    %20 = vector.load %arg1[%c0_24, %c0_25, %c0_26] : memref<2x8x256xf32, #tpu.memory_space<vmem>>, vector<1x8x256xf32>
    %21 = vector.shape_cast %20 : vector<1x8x256xf32> to vector<8x256xf32>
    %c17_i32 = arith.constant 17 : i32
    %22 = tpu.dynamic_rotate %21 by %c17_i32 dim 1 : vector<8x256xf32>, i32 -> vector<8x256xf32>
    %23 = vector.broadcast %5 : vector<1x256xf32> to vector<8x256xf32>
    %24 = arith.mulf %22, %23 : vector<8x256xf32>
    %c16_i32 = arith.constant 16 : i32
    %25 = tpu.dynamic_rotate %21 by %c16_i32 dim 1 : vector<8x256xf32>, i32 -> vector<8x256xf32>
    %26 = vector.broadcast %7 : vector<1x256xf32> to vector<8x256xf32>
    %27 = arith.mulf %25, %26 : vector<8x256xf32>
    %c15_i32 = arith.constant 15 : i32
    %28 = tpu.dynamic_rotate %21 by %c15_i32 dim 1 : vector<8x256xf32>, i32 -> vector<8x256xf32>
    %29 = vector.broadcast %9 : vector<1x256xf32> to vector<8x256xf32>
    %30 = arith.mulf %28, %29 : vector<8x256xf32>
    %c1_i32 = arith.constant 1 : i32
    %31 = tpu.dynamic_rotate %21 by %c1_i32 dim 1 : vector<8x256xf32>, i32 -> vector<8x256xf32>
    %32 = vector.broadcast %11 : vector<1x256xf32> to vector<8x256xf32>
    %33 = arith.mulf %31, %32 : vector<8x256xf32>
    %c255_i32 = arith.constant 255 : i32
    %34 = tpu.dynamic_rotate %21 by %c255_i32 dim 1 : vector<8x256xf32>, i32 -> vector<8x256xf32>
    %35 = vector.broadcast %13 : vector<1x256xf32> to vector<8x256xf32>
    %36 = arith.mulf %34, %35 : vector<8x256xf32>
    %c241_i32 = arith.constant 241 : i32
    %37 = tpu.dynamic_rotate %21 by %c241_i32 dim 1 : vector<8x256xf32>, i32 -> vector<8x256xf32>
    %38 = vector.broadcast %15 : vector<1x256xf32> to vector<8x256xf32>
    %39 = arith.mulf %37, %38 : vector<8x256xf32>
    %c240_i32 = arith.constant 240 : i32
    %40 = tpu.dynamic_rotate %21 by %c240_i32 dim 1 : vector<8x256xf32>, i32 -> vector<8x256xf32>
    %41 = vector.broadcast %17 : vector<1x256xf32> to vector<8x256xf32>
    %42 = arith.mulf %40, %41 : vector<8x256xf32>
    %c239_i32 = arith.constant 239 : i32
    %43 = tpu.dynamic_rotate %21 by %c239_i32 dim 1 : vector<8x256xf32>, i32 -> vector<8x256xf32>
    %44 = vector.broadcast %19 : vector<1x256xf32> to vector<8x256xf32>
    %45 = arith.mulf %43, %44 : vector<8x256xf32>
    %46 = tpu.concatenate %24, %27, %30, %33, %21, %36, %39, %42, %45 in 0 : vector<8x256xf32>, vector<8x256xf32>, vector<8x256xf32>, vector<8x256xf32>, vector<8x256xf32>, vector<8x256xf32>, vector<8x256xf32>, vector<8x256xf32>, vector<8x256xf32> -> vector<72x256xf32>
    %cst = arith.constant dense<0.000000e+00> : vector<8x256xf32>
    %47 = tpu.matmul %0, %46, %cst {dimension_numbers = #tpu.dot_dimension_numbers<[1], [0], [0], [1], [0, 0, 1, 1], [], []>} : vector<8x72xf32>, vector<72x256xf32>, vector<8x256xf32> -> vector<8x256xf32>
    %48 = vector.broadcast %2 : vector<8x1xf32> to vector<8x256xf32>
    %49 = arith.addf %47, %48 : vector<8x256xf32>
    %cst_27 = arith.constant dense<0.000000e+00> : vector<8xf32>
    %50 = vector.multi_reduction <add>, %49, %cst_27 [1] : vector<8x256xf32> to vector<8xf32>
    %51 = vector.shape_cast %50 : vector<8xf32> to vector<8x1xf32>
    %cst_28 = arith.constant 3.906250e-03 : f32
    %52 = vector.broadcast %cst_28 : f32 to vector<8x1xf32>
    %53 = arith.mulf %51, %52 : vector<8x1xf32>
    %54 = arith.mulf %49, %49 : vector<8x256xf32>
    %cst_29 = arith.constant dense<0.000000e+00> : vector<8xf32>
    %55 = vector.multi_reduction <add>, %54, %cst_29 [1] : vector<8x256xf32> to vector<8xf32>
    %56 = vector.shape_cast %55 : vector<8xf32> to vector<8x1xf32>
    %cst_30 = arith.constant 3.906250e-03 : f32
    %57 = vector.broadcast %cst_30 : f32 to vector<8x1xf32>
    %58 = arith.mulf %56, %57 : vector<8x1xf32>
    %59 = arith.mulf %53, %53 : vector<8x1xf32>
    %60 = arith.subf %58, %59 : vector<8x1xf32>
    %cst_31 = arith.constant 0.000000e+00 : f32
    %61 = vector.broadcast %cst_31 : f32 to vector<8x1xf32>
    %62 = arith.maximumf %60, %61 : vector<8x1xf32>
    %63 = vector.broadcast %53 : vector<8x1xf32> to vector<8x256xf32>
    %64 = arith.subf %49, %63 : vector<8x256xf32>
    %cst_32 = arith.constant 9.99999974E-6 : f32
    %65 = vector.broadcast %cst_32 : f32 to vector<8x1xf32>
    %66 = arith.addf %62, %65 : vector<8x1xf32>
    %67 = math.rsqrt %66 : vector<8x1xf32>
    %68 = vector.broadcast %67 : vector<8x1xf32> to vector<8x256xf32>
    %69 = arith.mulf %64, %68 : vector<8x256xf32>
    %cst_33 = arith.constant 0.000000e+00 : f32
    %70 = vector.broadcast %cst_33 : f32 to vector<8x256xf32>
    %71 = arith.maximumf %69, %70 : vector<8x256xf32>
    %c17_i32_34 = arith.constant 17 : i32
    %72 = tpu.dynamic_rotate %71 by %c17_i32_34 dim 1 : vector<8x256xf32>, i32 -> vector<8x256xf32>
    %73 = vector.broadcast %5 : vector<1x256xf32> to vector<8x256xf32>
    %74 = arith.mulf %72, %73 : vector<8x256xf32>
    %c16_i32_35 = arith.constant 16 : i32
    %75 = tpu.dynamic_rotate %71 by %c16_i32_35 dim 1 : vector<8x256xf32>, i32 -> vector<8x256xf32>
    %76 = vector.broadcast %7 : vector<1x256xf32> to vector<8x256xf32>
    %77 = arith.mulf %75, %76 : vector<8x256xf32>
    %c15_i32_36 = arith.constant 15 : i32
    %78 = tpu.dynamic_rotate %71 by %c15_i32_36 dim 1 : vector<8x256xf32>, i32 -> vector<8x256xf32>
    %79 = vector.broadcast %9 : vector<1x256xf32> to vector<8x256xf32>
    %80 = arith.mulf %78, %79 : vector<8x256xf32>
    %c1_i32_37 = arith.constant 1 : i32
    %81 = tpu.dynamic_rotate %71 by %c1_i32_37 dim 1 : vector<8x256xf32>, i32 -> vector<8x256xf32>
    %82 = vector.broadcast %11 : vector<1x256xf32> to vector<8x256xf32>
    %83 = arith.mulf %81, %82 : vector<8x256xf32>
    %c255_i32_38 = arith.constant 255 : i32
    %84 = tpu.dynamic_rotate %71 by %c255_i32_38 dim 1 : vector<8x256xf32>, i32 -> vector<8x256xf32>
    %85 = vector.broadcast %13 : vector<1x256xf32> to vector<8x256xf32>
    %86 = arith.mulf %84, %85 : vector<8x256xf32>
    %c241_i32_39 = arith.constant 241 : i32
    %87 = tpu.dynamic_rotate %71 by %c241_i32_39 dim 1 : vector<8x256xf32>, i32 -> vector<8x256xf32>
    %88 = vector.broadcast %15 : vector<1x256xf32> to vector<8x256xf32>
    %89 = arith.mulf %87, %88 : vector<8x256xf32>
    %c240_i32_40 = arith.constant 240 : i32
    %90 = tpu.dynamic_rotate %71 by %c240_i32_40 dim 1 : vector<8x256xf32>, i32 -> vector<8x256xf32>
    %91 = vector.broadcast %17 : vector<1x256xf32> to vector<8x256xf32>
    %92 = arith.mulf %90, %91 : vector<8x256xf32>
    %c239_i32_41 = arith.constant 239 : i32
    %93 = tpu.dynamic_rotate %71 by %c239_i32_41 dim 1 : vector<8x256xf32>, i32 -> vector<8x256xf32>
    %94 = vector.broadcast %19 : vector<1x256xf32> to vector<8x256xf32>
    %95 = arith.mulf %93, %94 : vector<8x256xf32>
    %96 = tpu.concatenate %74, %77, %80, %83, %71, %86, %89, %92, %95 in 0 : vector<8x256xf32>, vector<8x256xf32>, vector<8x256xf32>, vector<8x256xf32>, vector<8x256xf32>, vector<8x256xf32>, vector<8x256xf32>, vector<8x256xf32>, vector<8x256xf32> -> vector<72x256xf32>
    %cst_42 = arith.constant dense<0.000000e+00> : vector<8x256xf32>
    %97 = tpu.matmul %1, %96, %cst_42 {dimension_numbers = #tpu.dot_dimension_numbers<[1], [0], [0], [1], [0, 0, 1, 1], [], []>} : vector<8x72xf32>, vector<72x256xf32>, vector<8x256xf32> -> vector<8x256xf32>
    %98 = vector.broadcast %3 : vector<8x1xf32> to vector<8x256xf32>
    %99 = arith.addf %97, %98 : vector<8x256xf32>
    %cst_43 = arith.constant dense<0.000000e+00> : vector<8xf32>
    %100 = vector.multi_reduction <add>, %99, %cst_43 [1] : vector<8x256xf32> to vector<8xf32>
    %101 = vector.shape_cast %100 : vector<8xf32> to vector<8x1xf32>
    %cst_44 = arith.constant 3.906250e-03 : f32
    %102 = vector.broadcast %cst_44 : f32 to vector<8x1xf32>
    %103 = arith.mulf %101, %102 : vector<8x1xf32>
    %104 = arith.mulf %99, %99 : vector<8x256xf32>
    %cst_45 = arith.constant dense<0.000000e+00> : vector<8xf32>
    %105 = vector.multi_reduction <add>, %104, %cst_45 [1] : vector<8x256xf32> to vector<8xf32>
    %106 = vector.shape_cast %105 : vector<8xf32> to vector<8x1xf32>
    %cst_46 = arith.constant 3.906250e-03 : f32
    %107 = vector.broadcast %cst_46 : f32 to vector<8x1xf32>
    %108 = arith.mulf %106, %107 : vector<8x1xf32>
    %109 = arith.mulf %103, %103 : vector<8x1xf32>
    %110 = arith.subf %108, %109 : vector<8x1xf32>
    %cst_47 = arith.constant 0.000000e+00 : f32
    %111 = vector.broadcast %cst_47 : f32 to vector<8x1xf32>
    %112 = arith.maximumf %110, %111 : vector<8x1xf32>
    %113 = vector.broadcast %103 : vector<8x1xf32> to vector<8x256xf32>
    %114 = arith.subf %99, %113 : vector<8x256xf32>
    %cst_48 = arith.constant 9.99999974E-6 : f32
    %115 = vector.broadcast %cst_48 : f32 to vector<8x1xf32>
    %116 = arith.addf %112, %115 : vector<8x1xf32>
    %117 = math.rsqrt %116 : vector<8x1xf32>
    %118 = vector.broadcast %117 : vector<8x1xf32> to vector<8x256xf32>
    %119 = arith.mulf %114, %118 : vector<8x256xf32>
    %120 = arith.addf %21, %119 : vector<8x256xf32>
    %c0_49 = arith.constant 0 : index
    %c0_50 = arith.constant 0 : index
    %c0_51 = arith.constant 0 : index
    %121 = vector.load %arg7[%c0_49, %c0_50, %c0_51] : memref<2x8x256xf32, #tpu.memory_space<vmem>>, vector<1x8x256xf32>
    %122 = vector.shape_cast %121 : vector<1x8x256xf32> to vector<8x256xf32>
    %123 = vector.shape_cast %120 : vector<8x256xf32> to vector<1x8x256xf32>
    tpu.vector_store %arg7[%c0_49, %c0_50, %c0_51], %123 {strides = array<i32>} : memref<2x8x256xf32, #tpu.memory_space<vmem>>, vector<1x8x256xf32>,
    %c1_52 = arith.constant 1 : index
    %c0_53 = arith.constant 0 : index
    %c0_54 = arith.constant 0 : index
    %124 = vector.load %arg1[%c1_52, %c0_53, %c0_54] : memref<2x8x256xf32, #tpu.memory_space<vmem>>, vector<1x8x256xf32>
    %125 = vector.shape_cast %124 : vector<1x8x256xf32> to vector<8x256xf32>
    %c17_i32_55 = arith.constant 17 : i32
    %126 = tpu.dynamic_rotate %125 by %c17_i32_55 dim 1 : vector<8x256xf32>, i32 -> vector<8x256xf32>
    %127 = vector.broadcast %5 : vector<1x256xf32> to vector<8x256xf32>
    %128 = arith.mulf %126, %127 : vector<8x256xf32>
    %c16_i32_56 = arith.constant 16 : i32
    %129 = tpu.dynamic_rotate %125 by %c16_i32_56 dim 1 : vector<8x256xf32>, i32 -> vector<8x256xf32>
    %130 = vector.broadcast %7 : vector<1x256xf32> to vector<8x256xf32>
    %131 = arith.mulf %129, %130 : vector<8x256xf32>
    %c15_i32_57 = arith.constant 15 : i32
    %132 = tpu.dynamic_rotate %125 by %c15_i32_57 dim 1 : vector<8x256xf32>, i32 -> vector<8x256xf32>
    %133 = vector.broadcast %9 : vector<1x256xf32> to vector<8x256xf32>
    %134 = arith.mulf %132, %133 : vector<8x256xf32>
    %c1_i32_58 = arith.constant 1 : i32
    %135 = tpu.dynamic_rotate %125 by %c1_i32_58 dim 1 : vector<8x256xf32>, i32 -> vector<8x256xf32>
    %136 = vector.broadcast %11 : vector<1x256xf32> to vector<8x256xf32>
    %137 = arith.mulf %135, %136 : vector<8x256xf32>
    %c255_i32_59 = arith.constant 255 : i32
    %138 = tpu.dynamic_rotate %125 by %c255_i32_59 dim 1 : vector<8x256xf32>, i32 -> vector<8x256xf32>
    %139 = vector.broadcast %13 : vector<1x256xf32> to vector<8x256xf32>
    %140 = arith.mulf %138, %139 : vector<8x256xf32>
    %c241_i32_60 = arith.constant 241 : i32
    %141 = tpu.dynamic_rotate %125 by %c241_i32_60 dim 1 : vector<8x256xf32>, i32 -> vector<8x256xf32>
    %142 = vector.broadcast %15 : vector<1x256xf32> to vector<8x256xf32>
    %143 = arith.mulf %141, %142 : vector<8x256xf32>
    %c240_i32_61 = arith.constant 240 : i32
    %144 = tpu.dynamic_rotate %125 by %c240_i32_61 dim 1 : vector<8x256xf32>, i32 -> vector<8x256xf32>
    %145 = vector.broadcast %17 : vector<1x256xf32> to vector<8x256xf32>
    %146 = arith.mulf %144, %145 : vector<8x256xf32>
    %c239_i32_62 = arith.constant 239 : i32
    %147 = tpu.dynamic_rotate %125 by %c239_i32_62 dim 1 : vector<8x256xf32>, i32 -> vector<8x256xf32>
    %148 = vector.broadcast %19 : vector<1x256xf32> to vector<8x256xf32>
    %149 = arith.mulf %147, %148 : vector<8x256xf32>
    %150 = tpu.concatenate %128, %131, %134, %137, %125, %140, %143, %146, %149 in 0 : vector<8x256xf32>, vector<8x256xf32>, vector<8x256xf32>, vector<8x256xf32>, vector<8x256xf32>, vector<8x256xf32>, vector<8x256xf32>, vector<8x256xf32>, vector<8x256xf32> -> vector<72x256xf32>
    %cst_63 = arith.constant dense<0.000000e+00> : vector<8x256xf32>
    %151 = tpu.matmul %0, %150, %cst_63 {dimension_numbers = #tpu.dot_dimension_numbers<[1], [0], [0], [1], [0, 0, 1, 1], [], []>} : vector<8x72xf32>, vector<72x256xf32>, vector<8x256xf32> -> vector<8x256xf32>
    %152 = vector.broadcast %2 : vector<8x1xf32> to vector<8x256xf32>
    %153 = arith.addf %151, %152 : vector<8x256xf32>
    %cst_64 = arith.constant dense<0.000000e+00> : vector<8xf32>
    %154 = vector.multi_reduction <add>, %153, %cst_64 [1] : vector<8x256xf32> to vector<8xf32>
    %155 = vector.shape_cast %154 : vector<8xf32> to vector<8x1xf32>
    %cst_65 = arith.constant 3.906250e-03 : f32
    %156 = vector.broadcast %cst_65 : f32 to vector<8x1xf32>
    %157 = arith.mulf %155, %156 : vector<8x1xf32>
    %158 = arith.mulf %153, %153 : vector<8x256xf32>
    %cst_66 = arith.constant dense<0.000000e+00> : vector<8xf32>
    %159 = vector.multi_reduction <add>, %158, %cst_66 [1] : vector<8x256xf32> to vector<8xf32>
    %160 = vector.shape_cast %159 : vector<8xf32> to vector<8x1xf32>
    %cst_67 = arith.constant 3.906250e-03 : f32
    %161 = vector.broadcast %cst_67 : f32 to vector<8x1xf32>
    %162 = arith.mulf %160, %161 : vector<8x1xf32>
    %163 = arith.mulf %157, %157 : vector<8x1xf32>
    %164 = arith.subf %162, %163 : vector<8x1xf32>
    %cst_68 = arith.constant 0.000000e+00 : f32
    %165 = vector.broadcast %cst_68 : f32 to vector<8x1xf32>
    %166 = arith.maximumf %164, %165 : vector<8x1xf32>
    %167 = vector.broadcast %157 : vector<8x1xf32> to vector<8x256xf32>
    %168 = arith.subf %153, %167 : vector<8x256xf32>
    %cst_69 = arith.constant 9.99999974E-6 : f32
    %169 = vector.broadcast %cst_69 : f32 to vector<8x1xf32>
    %170 = arith.addf %166, %169 : vector<8x1xf32>
    %171 = math.rsqrt %170 : vector<8x1xf32>
    %172 = vector.broadcast %171 : vector<8x1xf32> to vector<8x256xf32>
    %173 = arith.mulf %168, %172 : vector<8x256xf32>
    %cst_70 = arith.constant 0.000000e+00 : f32
    %174 = vector.broadcast %cst_70 : f32 to vector<8x256xf32>
    %175 = arith.maximumf %173, %174 : vector<8x256xf32>
    %c17_i32_71 = arith.constant 17 : i32
    %176 = tpu.dynamic_rotate %175 by %c17_i32_71 dim 1 : vector<8x256xf32>, i32 -> vector<8x256xf32>
    %177 = vector.broadcast %5 : vector<1x256xf32> to vector<8x256xf32>
    %178 = arith.mulf %176, %177 : vector<8x256xf32>
    %c16_i32_72 = arith.constant 16 : i32
    %179 = tpu.dynamic_rotate %175 by %c16_i32_72 dim 1 : vector<8x256xf32>, i32 -> vector<8x256xf32>
    %180 = vector.broadcast %7 : vector<1x256xf32> to vector<8x256xf32>
    %181 = arith.mulf %179, %180 : vector<8x256xf32>
    %c15_i32_73 = arith.constant 15 : i32
    %182 = tpu.dynamic_rotate %175 by %c15_i32_73 dim 1 : vector<8x256xf32>, i32 -> vector<8x256xf32>
    %183 = vector.broadcast %9 : vector<1x256xf32> to vector<8x256xf32>
    %184 = arith.mulf %182, %183 : vector<8x256xf32>
    %c1_i32_74 = arith.constant 1 : i32
    %185 = tpu.dynamic_rotate %175 by %c1_i32_74 dim 1 : vector<8x256xf32>, i32 -> vector<8x256xf32>
    %186 = vector.broadcast %11 : vector<1x256xf32> to vector<8x256xf32>
    %187 = arith.mulf %185, %186 : vector<8x256xf32>
    %c255_i32_75 = arith.constant 255 : i32
    %188 = tpu.dynamic_rotate %175 by %c255_i32_75 dim 1 : vector<8x256xf32>, i32 -> vector<8x256xf32>
    %189 = vector.broadcast %13 : vector<1x256xf32> to vector<8x256xf32>
    %190 = arith.mulf %188, %189 : vector<8x256xf32>
    %c241_i32_76 = arith.constant 241 : i32
    %191 = tpu.dynamic_rotate %175 by %c241_i32_76 dim 1 : vector<8x256xf32>, i32 -> vector<8x256xf32>
    %192 = vector.broadcast %15 : vector<1x256xf32> to vector<8x256xf32>
    %193 = arith.mulf %191, %192 : vector<8x256xf32>
    %c240_i32_77 = arith.constant 240 : i32
    %194 = tpu.dynamic_rotate %175 by %c240_i32_77 dim 1 : vector<8x256xf32>, i32 -> vector<8x256xf32>
    %195 = vector.broadcast %17 : vector<1x256xf32> to vector<8x256xf32>
    %196 = arith.mulf %194, %195 : vector<8x256xf32>
    %c239_i32_78 = arith.constant 239 : i32
    %197 = tpu.dynamic_rotate %175 by %c239_i32_78 dim 1 : vector<8x256xf32>, i32 -> vector<8x256xf32>
    %198 = vector.broadcast %19 : vector<1x256xf32> to vector<8x256xf32>
    %199 = arith.mulf %197, %198 : vector<8x256xf32>
    %200 = tpu.concatenate %178, %181, %184, %187, %175, %190, %193, %196, %199 in 0 : vector<8x256xf32>, vector<8x256xf32>, vector<8x256xf32>, vector<8x256xf32>, vector<8x256xf32>, vector<8x256xf32>, vector<8x256xf32>, vector<8x256xf32>, vector<8x256xf32> -> vector<72x256xf32>
    %cst_79 = arith.constant dense<0.000000e+00> : vector<8x256xf32>
    %201 = tpu.matmul %1, %200, %cst_79 {dimension_numbers = #tpu.dot_dimension_numbers<[1], [0], [0], [1], [0, 0, 1, 1], [], []>} : vector<8x72xf32>, vector<72x256xf32>, vector<8x256xf32> -> vector<8x256xf32>
    %202 = vector.broadcast %3 : vector<8x1xf32> to vector<8x256xf32>
    %203 = arith.addf %201, %202 : vector<8x256xf32>
    %cst_80 = arith.constant dense<0.000000e+00> : vector<8xf32>
    %204 = vector.multi_reduction <add>, %203, %cst_80 [1] : vector<8x256xf32> to vector<8xf32>
    %205 = vector.shape_cast %204 : vector<8xf32> to vector<8x1xf32>
    %cst_81 = arith.constant 3.906250e-03 : f32
    %206 = vector.broadcast %cst_81 : f32 to vector<8x1xf32>
    %207 = arith.mulf %205, %206 : vector<8x1xf32>
    %208 = arith.mulf %203, %203 : vector<8x256xf32>
    %cst_82 = arith.constant dense<0.000000e+00> : vector<8xf32>
    %209 = vector.multi_reduction <add>, %208, %cst_82 [1] : vector<8x256xf32> to vector<8xf32>
    %210 = vector.shape_cast %209 : vector<8xf32> to vector<8x1xf32>
    %cst_83 = arith.constant 3.906250e-03 : f32
    %211 = vector.broadcast %cst_83 : f32 to vector<8x1xf32>
    %212 = arith.mulf %210, %211 : vector<8x1xf32>
    %213 = arith.mulf %207, %207 : vector<8x1xf32>
    %214 = arith.subf %212, %213 : vector<8x1xf32>
    %cst_84 = arith.constant 0.000000e+00 : f32
    %215 = vector.broadcast %cst_84 : f32 to vector<8x1xf32>
    %216 = arith.maximumf %214, %215 : vector<8x1xf32>
    %217 = vector.broadcast %207 : vector<8x1xf32> to vector<8x256xf32>
    %218 = arith.subf %203, %217 : vector<8x256xf32>
    %cst_85 = arith.constant 9.99999974E-6 : f32
    %219 = vector.broadcast %cst_85 : f32 to vector<8x1xf32>
    %220 = arith.addf %216, %219 : vector<8x1xf32>
    %221 = math.rsqrt %220 : vector<8x1xf32>
    %222 = vector.broadcast %221 : vector<8x1xf32> to vector<8x256xf32>
    %223 = arith.mulf %218, %222 : vector<8x256xf32>
    %224 = arith.addf %125, %223 : vector<8x256xf32>
    %c1_86 = arith.constant 1 : index
    %c0_87 = arith.constant 0 : index
    %c0_88 = arith.constant 0 : index
    %225 = vector.load %arg7[%c1_86, %c0_87, %c0_88] : memref<2x8x256xf32, #tpu.memory_space<vmem>>, vector<1x8x256xf32>
    %226 = vector.shape_cast %225 : vector<1x8x256xf32> to vector<8x256xf32>
    %227 = vector.shape_cast %224 : vector<8x256xf32> to vector<1x8x256xf32>
    tpu.vector_store %arg7[%c1_86, %c0_87, %c0_88], %227 {strides = array<i32>} : memref<2x8x256xf32, #tpu.memory_space<vmem>>, vector<1x8x256xf32>,
    return
  }
  func.func @transform_0(%arg0: i32) -> (i32, i32, i32) {
    %c0_i32 = arith.constant 0 : i32
    %c0_i32_0 = arith.constant 0 : i32
    %c0_i32_1 = arith.constant 0 : i32
    %c0_i32_2 = arith.constant 0 : i32
    return %c0_i32, %c0_i32_0, %c0_i32_1 : i32, i32, i32
  }
  func.func @transform_1(%arg0: i32) -> (i32, i32) {
    %c0_i32 = arith.constant 0 : i32
    %c0_i32_0 = arith.constant 0 : i32
    %c0_i32_1 = arith.constant 0 : i32
    return %c0_i32, %c0_i32_0 : i32, i32
  }
  func.func @transform_2(%arg0: i32) -> (i32, i32) {
    %c0_i32 = arith.constant 0 : i32
    %c0_i32_0 = arith.constant 0 : i32
    %c0_i32_1 = arith.constant 0 : i32
    return %c0_i32, %c0_i32_0 : i32, i32
  }
  func.func @transform_3(%arg0: i32) -> (i32, i32) {
    %c0_i32 = arith.constant 0 : i32
    %c0_i32_0 = arith.constant 0 : i32
    %c0_i32_1 = arith.constant 0 : i32
    return %c0_i32, %c0_i32_0 : i32, i32
  }
  func.func @transform_4(%arg0: i32) -> (i32, i32) {
    %c0_i32 = arith.constant 0 : i32
    %c0_i32_0 = arith.constant 0 : i32
    %c0_i32_1 = arith.constant 0 : i32
    return %c0_i32, %c0_i32_0 : i32, i32
  }
  func.func @transform_5(%arg0: i32) -> (i32, i32, i32) {
    %c0_i32 = arith.constant 0 : i32
    %c0_i32_0 = arith.constant 0 : i32
    %c0_i32_1 = arith.constant 0 : i32
    %c0_i32_2 = arith.constant 0 : i32
    return %c0_i32, %c0_i32_0, %c0_i32_1 : i32, i32, i32
  }
  func.func @transform_6(%arg0: i32) -> (i32, i32, i32) {
    %c0_i32 = arith.constant 0 : i32
    %c0_i32_0 = arith.constant 0 : i32
    %c0_i32_1 = arith.constant 0 : i32
    %c0_i32_2 = arith.constant 0 : i32
    return %c0_i32, %c0_i32_0, %c0_i32_1 : i32, i32, i32
  }
}

</mosaic_0001>

<llo_original>
// kernel: tpu_custom_call.1
$region0: #{tpu_custom_call.1}
  #allocation0 [shape = 'u32[]', space=smem, size = 0x4, offset = 0x4, fixed_abs, tag = 'smem constant byte address 0x4 - core index']
  #allocation1 [shape = 'u32[72,128]{1,0:T(1,128)}', space=vmem, size = 0x9000, scoped, tag = 'internal scratch']
  %s0 = inlined_call_operand.hbm [shape: f32[2,8,256], index: 0, kind: input, shape index: {}]
  %s1 = inlined_call_operand.vmem [shape: f32[8,72], index: 1, kind: input, shape index: {}]
  %s2 = inlined_call_operand.vmem [shape: f32[8,1], index: 2, kind: input, shape index: {}]
  %s3 = inlined_call_operand.vmem [shape: f32[8,72], index: 3, kind: input, shape index: {}]
  %s4 = inlined_call_operand.vmem [shape: f32[8,1], index: 4, kind: input, shape index: {}]
  %s5 = inlined_call_operand.hbm [shape: f32[9,1,256], index: 5, kind: input, shape index: {}]
  %s6 = inlined_call_operand.hbm [shape: f32[2,8,256], index: 6, kind: output, shape index: {}]
  %s7 = sld [smem:[#allocation0]]
  $region42: #{tpu_custom_call.1} parent=0
    _
  %s9 = ssub.s32 1, %s7
  %s10 = scalar_select 0, %s9, %s7
  $region1: #{tpu_custom_call.1} parent=0
    #allocation2 [shape = 'u8[16384]{0}', space=vmem, size = 0x4000, scoped, tag = 'input window, operand 0, single buffered']
    #allocation3 [shape = 's32[1]{0}', space=sflag, size = 0x4, scoped, tag = 'scoped memory for tpu_custom_call.1']
    #allocation4 [shape = 's32[1]{0}', space=sflag, size = 0x4, scoped, tag = 'scoped memory for tpu_custom_call.1']
    #allocation5 [shape = 'u8[9216]{0}', space=vmem, size = 0x2400, scoped, tag = 'input window, operand 5, single buffered']
    #allocation6 [shape = 's32[1]{0}', space=sflag, size = 0x4, scoped, tag = 'scoped memory for tpu_custom_call.1']
    #allocation7 [shape = 'u8[16384]{0}', space=vmem, size = 0x4000, scoped, tag = 'output window, operand 0, single buffered']
    %11 = vsyncpa [#allocation3], 0
    %12 = vsyncpa [#allocation6], 0
    %13 = vsyncpa [#allocation4], 0
    // Predicated region
    $region2: #{tpu_custom_call.1} parent=1 // pred_check
      _
    $region3: #{tpu_custom_call.1} parent=1 // pred_check_branch
      %15 = sbr.rel (0) target = $region5
    $region4: #{tpu_custom_call.1} parent=1 // pred_region
      %17 = vsyncadd [#allocation3], 0
      %s18 = sshll.u32 %s0, 4
      %s19 = int_to_ptr.hbm [resolvable:$true] %s18
      %s20 = sshll.u32 [#allocation2], 4
      %s21 = int_to_ptr.vmem [resolvable:$true] %s20
      %26 = dma.hbm_to_vmem [thread:$0]  %s19, 512, %s21, [#allocation3], 256, 256, 16
    $region5: #{tpu_custom_call.1} parent=1 // pred_fallthru
      _
    // Predicated region
    $region6: #{tpu_custom_call.1} parent=1 // pred_check
      _
    $region7: #{tpu_custom_call.1} parent=1 // pred_check_branch
      %28 = sbr.rel (0) target = $region9
    $region8: #{tpu_custom_call.1} parent=1 // pred_region
      _
    $region9: #{tpu_custom_call.1} parent=1 // pred_fallthru
      _
    // Predicated region
    $region10: #{tpu_custom_call.1} parent=1 // pred_check
      _
    $region11: #{tpu_custom_call.1} parent=1 // pred_check_branch
      %30 = sbr.rel (0) target = $region13
    $region12: #{tpu_custom_call.1} parent=1 // pred_region
      _
    $region13: #{tpu_custom_call.1} parent=1 // pred_fallthru
      _
    // Predicated region
    $region14: #{tpu_custom_call.1} parent=1 // pred_check
      _
    $region15: #{tpu_custom_call.1} parent=1 // pred_check_branch
      %32 = sbr.rel (0) target = $region17
    $region16: #{tpu_custom_call.1} parent=1 // pred_region
      _
    $region17: #{tpu_custom_call.1} parent=1 // pred_fallthru
      _
    // Predicated region
    $region18: #{tpu_custom_call.1} parent=1 // pred_check
      _
    $region19: #{tpu_custom_call.1} parent=1 // pred_check_branch
      %34 = sbr.rel (0) target = $region21
    $region20: #{tpu_custom_call.1} parent=1 // pred_region
      _
    $region21: #{tpu_custom_call.1} parent=1 // pred_fallthru
      _
    // Predicated region
    $region22: #{tpu_custom_call.1} parent=1 // pred_check
      _
    $region23: #{tpu_custom_call.1} parent=1 // pred_check_branch
      %36 = sbr.rel (0) target = $region25
    $region24: #{tpu_custom_call.1} parent=1 // pred_region
      %38 = vsyncadd [#allocation6], 0
      %s39 = sshll.u32 %s5, 4
      %s40 = int_to_ptr.hbm [resolvable:$true] %s39
      %s41 = sshll.u32 [#allocation5], 4
      %s42 = int_to_ptr.vmem [resolvable:$true] %s41
      %47 = dma.hbm_to_vmem [thread:$0]  %s40, 288, %s42, [#allocation6], 32, 32, 2
    $region25: #{tpu_custom_call.1} parent=1 // pred_fallthru
      _
    // Predicated region
    $region26: #{tpu_custom_call.1} parent=1 // pred_check
      _
    $region27: #{tpu_custom_call.1} parent=1 // pred_check_branch
      %49 = sbr.rel (0) target = $region29
    $region28: #{tpu_custom_call.1} parent=1 // pred_region
      %51 = dma.done [#allocation3], 512
    $region29: #{tpu_custom_call.1} parent=1 // pred_fallthru
      _
    // Predicated region
    $region30: #{tpu_custom_call.1} parent=1 // pred_check
      _
    $region31: #{tpu_custom_call.1} parent=1 // pred_check_branch
      %53 = sbr.rel (0) target = $region33
    $region32: #{tpu_custom_call.1} parent=1 // pred_region
      %55 = dma.done [#allocation6], 288
    $region33: #{tpu_custom_call.1} parent=1 // pred_fallthru
      _
    %v56 = vld [vmem:[%s1] sm:$0xff]
    %v57 = vld [vmem:[%s3] sm:$0xff]
    %v58 = vld [vmem:[%s2] sm:$0xff]
    %v59 = vld [vmem:[%s4] sm:$0xff]
    %v60 = vld [vmem:[#allocation5] sm:$0x3]
    %s61 = scalar_lea.vmem [#allocation5], 2
    %v62 = vld [vmem:[%s61] sm:$0x3]
    %s63 = scalar_lea.vmem [#allocation5], 4
    %v64 = vld [vmem:[%s63] sm:$0x3]
    %s65 = scalar_lea.vmem [#allocation5], 6
    %v66 = vld [vmem:[%s65] sm:$0x3]
    %s67 = scalar_lea.vmem [#allocation5], 10
    %v68 = vld [vmem:[%s67] sm:$0x3]
    %s69 = scalar_lea.vmem [#allocation5], 12
    %v70 = vld [vmem:[%s69] sm:$0x3]
    %s71 = scalar_lea.vmem [#allocation5], 14
    %v72 = vld [vmem:[%s71] sm:$0x3]
    %s73 = scalar_lea.vmem [#allocation5], 16
    %v74 = vld [vmem:[%s73] sm:$0x3]
    %v75 = vld [vmem:[#allocation2] sm:$0xff]
    %v76 = vld [vmem:[#allocation2 + $0x8] sm:$0xff]
    %77 = vrot.lane.b32.xlu0 %v75, 17
    %v78 = vpop.permute.xlu0 %77
    %79 = vrot.lane.b32.xlu0 %v76, 17
    %v80 = vpop.permute.xlu0 %79
    %v81 = vlaneseq
    %v82 = vand.u32 %v81, 127
    %vm83 = vcmp.lt.s32.totalorder %v82, 17
    %v84 = vsel %vm83, %v78, %v80
    %v85 = vsel %vm83, %v80, %v78
    %v87 = vperm.slane %v60, 0
    %v88 = vperm.slane %v60, 1
    %v91 = vmul.f32 %v85, %v87
    %v92 = vmul.f32 %v84, %v88
    %93 = vrot.lane.b32.xlu0 %v75, 16
    %v94 = vpop.permute.xlu0 %93
    %95 = vrot.lane.b32.xlu0 %v76, 16
    %v96 = vpop.permute.xlu0 %95
    %vm97 = vcmp.lt.s32.totalorder %v82, 16
    %v98 = vsel %vm97, %v94, %v96
    %v99 = vsel %vm97, %v96, %v94
    %v101 = vperm.slane %v62, 0
    %v102 = vperm.slane %v62, 1
    %v105 = vmul.f32 %v99, %v101
    %v106 = vmul.f32 %v98, %v102
    %107 = vrot.lane.b32.xlu0 %v75, 15
    %v108 = vpop.permute.xlu0 %107
    %109 = vrot.lane.b32.xlu0 %v76, 15
    %v110 = vpop.permute.xlu0 %109
    %vm111 = vcmp.lt.s32.totalorder %v82, 15
    %v112 = vsel %vm111, %v108, %v110
    %v113 = vsel %vm111, %v110, %v108
    %v115 = vperm.slane %v64, 0
    %v116 = vperm.slane %v64, 1
    %v119 = vmul.f32 %v113, %v115
    %v120 = vmul.f32 %v112, %v116
    %121 = vrot.lane.b32.xlu0 %v75, 1
    %v122 = vpop.permute.xlu0 %121
    %123 = vrot.lane.b32.xlu0 %v76, 1
    %v124 = vpop.permute.xlu0 %123
    %vm125 = vcmp.lt.s32.totalorder %v82, 1
    %v126 = vsel %vm125, %v122, %v124
    %v127 = vsel %vm125, %v124, %v122
    %v129 = vperm.slane %v66, 0
    %v130 = vperm.slane %v66, 1
    %v133 = vmul.f32 %v127, %v129
    %v134 = vmul.f32 %v126, %v130
    %135 = vrot.lane.b32.xlu0 %v75, 127
    %v136 = vpop.permute.xlu0 %135
    %137 = vrot.lane.b32.xlu0 %v76, 127
    %v138 = vpop.permute.xlu0 %137
    %vm139 = vcmp.lt.s32.totalorder %v82, 127
    %v140 = vsel %vm139, %v136, %v138
    %v141 = vsel %vm139, %v138, %v136
    %v143 = vperm.slane %v68, 0
    %v144 = vperm.slane %v68, 1
    %v147 = vmul.f32 %v140, %v143
    %v148 = vmul.f32 %v141, %v144
    %149 = vrot.lane.b32.xlu0 %v75, 113
    %v150 = vpop.permute.xlu0 %149
    %151 = vrot.lane.b32.xlu0 %v76, 113
    %v152 = vpop.permute.xlu0 %151
    %vm153 = vcmp.lt.s32.totalorder %v82, 113
    %v154 = vsel %vm153, %v150, %v152
    %v155 = vsel %vm153, %v152, %v150
    %v157 = vperm.slane %v70, 0
    %v158 = vperm.slane %v70, 1
    %v161 = vmul.f32 %v154, %v157
    %v162 = vmul.f32 %v155, %v158
    %163 = vrot.lane.b32.xlu0 %v75, 112
    %v164 = vpop.permute.xlu0 %163
    %165 = vrot.lane.b32.xlu0 %v76, 112
    %v166 = vpop.permute.xlu0 %165
    %vm167 = vcmp.lt.s32.totalorder %v82, 112
    %v168 = vsel %vm167, %v164, %v166
    %v169 = vsel %vm167, %v166, %v164
    %v171 = vperm.slane %v72, 0
    %v172 = vperm.slane %v72, 1
    %v175 = vmul.f32 %v168, %v171
    %v176 = vmul.f32 %v169, %v172
    %177 = vrot.lane.b32.xlu0 %v75, 111
    %v178 = vpop.permute.xlu0 %177
    %179 = vrot.lane.b32.xlu0 %v76, 111
    %v180 = vpop.permute.xlu0 %179
    %vm181 = vcmp.lt.s32.totalorder %v82, 111
    %v182 = vsel %vm181, %v178, %v180
    %v183 = vsel %vm181, %v180, %v178
    %v185 = vperm.slane %v74, 0
    %v186 = vperm.slane %v74, 1
    %v189 = vmul.f32 %v182, %v185
    %v190 = vmul.f32 %v183, %v186
    %192 = vset.pattern.permute.xlu0 0
    %193 = vperm.xlu0 %192, %v58
    %v194 = vpop.permute.xlu0 %193
    %vm196 = vcmask 588800
    %v198 = vsel %vm196, %v56, 0
    %200 = vmatpush.msra.mxu0 0.0
    %201 = vmatpush.msra.mxu0 0.0
    %202 = vmatpush.msra.mxu0 0.0
    %203 = vmatpush.msra.mxu0 0.0
    %204 = vmatpush.msra.mxu0 0.0
    %205 = vmatpush.msra.mxu0 0.0
    %206 = vmatpush.msra.mxu0 0.0
    %207 = vmatpush.msra.mxu0 %v189
    %208 = vmatpush.msra.mxu0 %v175
    %209 = vmatpush.msra.mxu0 %v161
    %210 = vmatpush.msra.mxu0 %v147
    %211 = vmatpush.msra.mxu0 %v75
    %212 = vmatpush.msra.mxu0 %v133
    %213 = vmatpush.msra.mxu0 %v119
    %214 = vmatpush.msra.mxu0 %v105
    %215 = vmatpush.msra.mxu0 %v91
    %216 = vmatmul.f32.gmra.mxu0 %v198
    %v217 = vpop.f32.mrf.mxu0
    %v218 = vadd.f32 %v194, %v217
    %219 = vdwg.mxu0
    %220 = vmatpush.msra.mxu0 0.0
    %221 = vmatpush.msra.mxu0 0.0
    %222 = vmatpush.msra.mxu0 0.0
    %223 = vmatpush.msra.mxu0 0.0
    %224 = vmatpush.msra.mxu0 0.0
    %225 = vmatpush.msra.mxu0 0.0
    %226 = vmatpush.msra.mxu0 0.0
    %227 = vmatpush.msra.mxu0 %v190
    %228 = vmatpush.msra.mxu0 %v176
    %229 = vmatpush.msra.mxu0 %v162
    %230 = vmatpush.msra.mxu0 %v148
    %231 = vmatpush.msra.mxu0 %v76
    %232 = vmatpush.msra.mxu0 %v134
    %233 = vmatpush.msra.mxu0 %v120
    %234 = vmatpush.msra.mxu0 %v106
    %235 = vmatpush.msra.mxu0 %v92
    %236 = vmatmul.f32.gmra.mxu0 %v198
    %v237 = vpop.f32.mrf.mxu0
    %v238 = vadd.f32 %v194, %v237
    %239 = vdwg.mxu0
    %v240 = vadd.f32 %v218, %v238
    %241 = vadd.xlane.f32.xlu0 %v240
    %v242 = vpop.xlane.xlu0 %241
    %v243 = vmul.f32 %v242, 0.00390625
    %v244 = vmul.f32 %v218, %v218
    %v245 = vmul.f32 %v238, %v238
    %v246 = vadd.f32 %v244, %v245
    %247 = vadd.xlane.f32.xlu0 %v246
    %v248 = vpop.xlane.xlu0 %247
    %v249 = vmul.f32 %v248, 0.00390625
    %v250 = vmul.f32 %v243, %v243
    %v251 = vsub.f32 %v249, %v250
    %v252 = vmax.f32 %v251, 0.0
    %v253 = vsub.f32 %v218, %v243
    %v254 = vsub.f32 %v238, %v243
    %v255 = vadd.f32 %v252, 1e-05
    %v256 = vrsqrt.pop %v255
    %v257 = vmul.f32 %v256, %v255
    %v258 = vmul.f32 %v257, %v256
    %v259 = vmul.f32 0.5, %v258
    %v260 = vsub.f32 1.5, %v259
    %v261 = vmul.f32 %v256, %v260
    %vm262 = vweird.f32 %v255
    %vm263 = vweird.f32 %v256
    %vm264 = vmor %vm262, %vm263
    %v265 = vsel %vm264, %v256, %v261
    %v266 = vmul.f32 %v253, %v265
    %v267 = vmul.f32 %v254, %v265
    %v268 = vmax.f32 %v266, 0.0
    %v269 = vmax.f32 %v267, 0.0
    %270 = vrot.lane.b32.xlu0 %v268, 17
    %v271 = vpop.permute.xlu0 %270
    %272 = vrot.lane.b32.xlu0 %v269, 17
    %v273 = vpop.permute.xlu0 %272
    %v274 = vsel %vm83, %v271, %v273
    %v275 = vsel %vm83, %v273, %v271
    %v276 = vmul.f32 %v275, %v87
    %v277 = vmul.f32 %v274, %v88
    %278 = vrot.lane.b32.xlu0 %v268, 16
    %v279 = vpop.permute.xlu0 %278
    %280 = vrot.lane.b32.xlu0 %v269, 16
    %v281 = vpop.permute.xlu0 %280
    %v282 = vsel %vm97, %v279, %v281
    %v283 = vsel %vm97, %v281, %v279
    %v284 = vmul.f32 %v283, %v101
    %v285 = vmul.f32 %v282, %v102
    %286 = vrot.lane.b32.xlu0 %v268, 15
    %v287 = vpop.permute.xlu0 %286
    %288 = vrot.lane.b32.xlu0 %v269, 15
    %v289 = vpop.permute.xlu0 %288
    %v290 = vsel %vm111, %v287, %v289
    %v291 = vsel %vm111, %v289, %v287
    %v292 = vmul.f32 %v291, %v115
    %v293 = vmul.f32 %v290, %v116
    %294 = vrot.lane.b32.xlu0 %v268, 1
    %v295 = vpop.permute.xlu0 %294
    %296 = vrot.lane.b32.xlu0 %v269, 1
    %v297 = vpop.permute.xlu0 %296
    %v298 = vsel %vm125, %v295, %v297
    %v299 = vsel %vm125, %v297, %v295
    %v300 = vmul.f32 %v299, %v129
    %v301 = vmul.f32 %v298, %v130
    %302 = vrot.lane.b32.xlu0 %v268, 127
    %v303 = vpop.permute.xlu0 %302
    %304 = vrot.lane.b32.xlu0 %v269, 127
    %v305 = vpop.permute.xlu0 %304
    %v306 = vsel %vm139, %v303, %v305
    %v307 = vsel %vm139, %v305, %v303
    %v308 = vmul.f32 %v306, %v143
    %v309 = vmul.f32 %v307, %v144
    %310 = vrot.lane.b32.xlu0 %v268, 113
    %v311 = vpop.permute.xlu0 %310
    %312 = vrot.lane.b32.xlu0 %v269, 113
    %v313 = vpop.permute.xlu0 %312
    %v314 = vsel %vm153, %v311, %v313
    %v315 = vsel %vm153, %v313, %v311
    %v316 = vmul.f32 %v314, %v157
    %v317 = vmul.f32 %v315, %v158
    %318 = vrot.lane.b32.xlu0 %v268, 112
    %v319 = vpop.permute.xlu0 %318
    %320 = vrot.lane.b32.xlu0 %v269, 112
    %v321 = vpop.permute.xlu0 %320
    %v322 = vsel %vm167, %v319, %v321
    %v323 = vsel %vm167, %v321, %v319
    %v324 = vmul.f32 %v322, %v171
    %v325 = vmul.f32 %v323, %v172
    %326 = vrot.lane.b32.xlu0 %v268, 111
    %v327 = vpop.permute.xlu0 %326
    %328 = vrot.lane.b32.xlu0 %v269, 111
    %v329 = vpop.permute.xlu0 %328
    %v330 = vsel %vm181, %v327, %v329
    %v331 = vsel %vm181, %v329, %v327
    %v332 = vmul.f32 %v330, %v185
    %v333 = vmul.f32 %v331, %v186
    %335 = vset.pattern.permute.xlu0 0
    %336 = vperm.xlu0 %335, %v59
    %v337 = vpop.permute.xlu0 %336
    %v340 = vsel %vm196, %v57, 0
    %342 = vmatpush.msra.mxu0 0.0
    %343 = vmatpush.msra.mxu0 0.0
    %344 = vmatpush.msra.mxu0 0.0
    %345 = vmatpush.msra.mxu0 0.0
    %346 = vmatpush.msra.mxu0 0.0
    %347 = vmatpush.msra.mxu0 0.0
    %348 = vmatpush.msra.mxu0 0.0
    %349 = vmatpush.msra.mxu0 %v332
    %350 = vmatpush.msra.mxu0 %v324
    %351 = vmatpush.msra.mxu0 %v316
    %352 = vmatpush.msra.mxu0 %v308
    %353 = vmatpush.msra.mxu0 %v268
    %354 = vmatpush.msra.mxu0 %v300
    %355 = vmatpush.msra.mxu0 %v292
    %356 = vmatpush.msra.mxu0 %v284
    %357 = vmatpush.msra.mxu0 %v276
    %358 = vmatmul.f32.gmra.mxu0 %v340
    %v359 = vpop.f32.mrf.mxu0
    %v360 = vadd.f32 %v337, %v359
    %361 = vdwg.mxu0
    %362 = vmatpush.msra.mxu0 0.0
    %363 = vmatpush.msra.mxu0 0.0
    %364 = vmatpush.msra.mxu0 0.0
    %365 = vmatpush.msra.mxu0 0.0
    %366 = vmatpush.msra.mxu0 0.0
    %367 = vmatpush.msra.mxu0 0.0
    %368 = vmatpush.msra.mxu0 0.0
    %369 = vmatpush.msra.mxu0 %v333
    %370 = vmatpush.msra.mxu0 %v325
    %371 = vmatpush.msra.mxu0 %v317
    %372 = vmatpush.msra.mxu0 %v309
    %373 = vmatpush.msra.mxu0 %v269
    %374 = vmatpush.msra.mxu0 %v301
    %375 = vmatpush.msra.mxu0 %v293
    %376 = vmatpush.msra.mxu0 %v285
    %377 = vmatpush.msra.mxu0 %v277
    %378 = vmatmul.f32.gmra.mxu0 %v340
    %v379 = vpop.f32.mrf.mxu0
    %v380 = vadd.f32 %v337, %v379
    %381 = vdwg.mxu0
    %v382 = vadd.f32 %v360, %v380
    %383 = vadd.xlane.f32.xlu0 %v382
    %v384 = vpop.xlane.xlu0 %383
    %v385 = vmul.f32 %v384, 0.00390625
    %v386 = vmul.f32 %v360, %v360
    %v387 = vmul.f32 %v380, %v380
    %v388 = vadd.f32 %v386, %v387
    %389 = vadd.xlane.f32.xlu0 %v388
    %v390 = vpop.xlane.xlu0 %389
    %v391 = vmul.f32 %v390, 0.00390625
    %v392 = vmul.f32 %v385, %v385
    %v393 = vsub.f32 %v391, %v392
    %v394 = vmax.f32 %v393, 0.0
    %v395 = vsub.f32 %v360, %v385
    %v396 = vsub.f32 %v380, %v385
    %v397 = vadd.f32 %v394, 1e-05
    %v398 = vrsqrt.pop %v397
    %v399 = vmul.f32 %v398, %v397
    %v400 = vmul.f32 %v399, %v398
    %v401 = vmul.f32 0.5, %v400
    %v402 = vsub.f32 1.5, %v401
    %v403 = vmul.f32 %v398, %v402
    %vm404 = vweird.f32 %v397
    %vm405 = vweird.f32 %v398
    %vm406 = vmor %vm404, %vm405
    %v407 = vsel %vm406, %v398, %v403
    %v408 = vmul.f32 %v395, %v407
    %v409 = vmul.f32 %v396, %v407
    %v410 = vadd.f32 %v75, %v408
    %v411 = vadd.f32 %v76, %v409
    %412 = vst [vmem:[#allocation7] sm:$0xff] %v410
    %413 = vst [vmem:[#allocation7 + $0x8] sm:$0xff] %v411
    %s414 = scalar_lea.vmem [#allocation2], 16
    %v415 = vld [vmem:[%s414] sm:$0xff]
    %v416 = vld [vmem:[%s414 + $0x8] sm:$0xff]
    %417 = vrot.lane.b32.xlu0 %v415, 17
    %v418 = vpop.permute.xlu0 %417
    %419 = vrot.lane.b32.xlu0 %v416, 17
    %v420 = vpop.permute.xlu0 %419
    %v421 = vsel %vm83, %v418, %v420
    %v422 = vsel %vm83, %v420, %v418
    %v423 = vmul.f32 %v422, %v87
    %v424 = vmul.f32 %v421, %v88
    %425 = vrot.lane.b32.xlu0 %v415, 16
    %v426 = vpop.permute.xlu0 %425
    %427 = vrot.lane.b32.xlu0 %v416, 16
    %v428 = vpop.permute.xlu0 %427
    %v429 = vsel %vm97, %v426, %v428
    %v430 = vsel %vm97, %v428, %v426
    %v431 = vmul.f32 %v430, %v101
    %v432 = vmul.f32 %v429, %v102
    %433 = vrot.lane.b32.xlu0 %v415, 15
    %v434 = vpop.permute.xlu0 %433
    %435 = vrot.lane.b32.xlu0 %v416, 15
    %v436 = vpop.permute.xlu0 %435
    %v437 = vsel %vm111, %v434, %v436
    %v438 = vsel %vm111, %v436, %v434
    %v439 = vmul.f32 %v438, %v115
    %v440 = vmul.f32 %v437, %v116
    %441 = vrot.lane.b32.xlu0 %v415, 1
    %v442 = vpop.permute.xlu0 %441
    %443 = vrot.lane.b32.xlu0 %v416, 1
    %v444 = vpop.permute.xlu0 %443
    %v445 = vsel %vm125, %v442, %v444
    %v446 = vsel %vm125, %v444, %v442
    %v447 = vmul.f32 %v446, %v129
    %v448 = vmul.f32 %v445, %v130
    %449 = vrot.lane.b32.xlu0 %v415, 127
    %v450 = vpop.permute.xlu0 %449
    %451 = vrot.lane.b32.xlu0 %v416, 127
    %v452 = vpop.permute.xlu0 %451
    %v453 = vsel %vm139, %v450, %v452
    %v454 = vsel %vm139, %v452, %v450
    %v455 = vmul.f32 %v453, %v143
    %v456 = vmul.f32 %v454, %v144
    %457 = vrot.lane.b32.xlu0 %v415, 113
    %v458 = vpop.permute.xlu0 %457
    %459 = vrot.lane.b32.xlu0 %v416, 113
    %v460 = vpop.permute.xlu0 %459
    %v461 = vsel %vm153, %v458, %v460
    %v462 = vsel %vm153, %v460, %v458
    %v463 = vmul.f32 %v461, %v157
    %v464 = vmul.f32 %v462, %v158
    %465 = vrot.lane.b32.xlu0 %v415, 112
    %v466 = vpop.permute.xlu0 %465
    %467 = vrot.lane.b32.xlu0 %v416, 112
    %v468 = vpop.permute.xlu0 %467
    %v469 = vsel %vm167, %v466, %v468
    %v470 = vsel %vm167, %v468, %v466
    %v471 = vmul.f32 %v469, %v171
    %v472 = vmul.f32 %v470, %v172
    %473 = vrot.lane.b32.xlu0 %v415, 111
    %v474 = vpop.permute.xlu0 %473
    %475 = vrot.lane.b32.xlu0 %v416, 111
    %v476 = vpop.permute.xlu0 %475
    %v477 = vsel %vm181, %v474, %v476
    %v478 = vsel %vm181, %v476, %v474
    %v479 = vmul.f32 %v477, %v185
    %v480 = vmul.f32 %v478, %v186
    %481 = vmatpush.msra.mxu0 0.0
    %482 = vmatpush.msra.mxu0 0.0
    %483 = vmatpush.msra.mxu0 0.0
    %484 = vmatpush.msra.mxu0 0.0
    %485 = vmatpush.msra.mxu0 0.0
    %486 = vmatpush.msra.mxu0 0.0
    %487 = vmatpush.msra.mxu0 0.0
    %488 = vmatpush.msra.mxu0 %v479
    %489 = vmatpush.msra.mxu0 %v471
    %490 = vmatpush.msra.mxu0 %v463
    %491 = vmatpush.msra.mxu0 %v455
    %492 = vmatpush.msra.mxu0 %v415
    %493 = vmatpush.msra.mxu0 %v447
    %494 = vmatpush.msra.mxu0 %v439
    %495 = vmatpush.msra.mxu0 %v431
    %496 = vmatpush.msra.mxu0 %v423
    %497 = vmatmul.f32.gmra.mxu0 %v198
    %v498 = vpop.f32.mrf.mxu0
    %v499 = vadd.f32 %v194, %v498
    %500 = vdwg.mxu0
    %501 = vmatpush.msra.mxu0 0.0
    %502 = vmatpush.msra.mxu0 0.0
    %503 = vmatpush.msra.mxu0 0.0
    %504 = vmatpush.msra.mxu0 0.0
    %505 = vmatpush.msra.mxu0 0.0
    %506 = vmatpush.msra.mxu0 0.0
    %507 = vmatpush.msra.mxu0 0.0
    %508 = vmatpush.msra.mxu0 %v480
    %509 = vmatpush.msra.mxu0 %v472
    %510 = vmatpush.msra.mxu0 %v464
    %511 = vmatpush.msra.mxu0 %v456
    %512 = vmatpush.msra.mxu0 %v416
    %513 = vmatpush.msra.mxu0 %v448
    %514 = vmatpush.msra.mxu0 %v440
    %515 = vmatpush.msra.mxu0 %v432
    %516 = vmatpush.msra.mxu0 %v424
    %517 = vmatmul.f32.gmra.mxu0 %v198
    %v518 = vpop.f32.mrf.mxu0
    %v519 = vadd.f32 %v194, %v518
    %520 = vdwg.mxu0
    %v521 = vadd.f32 %v499, %v519
    %522 = vadd.xlane.f32.xlu0 %v521
    %v523 = vpop.xlane.xlu0 %522
    %v524 = vmul.f32 %v523, 0.00390625
    %v525 = vmul.f32 %v499, %v499
    %v526 = vmul.f32 %v519, %v519
    %v527 = vadd.f32 %v525, %v526
    %528 = vadd.xlane.f32.xlu0 %v527
    %v529 = vpop.xlane.xlu0 %528
    %v530 = vmul.f32 %v529, 0.00390625
    %v531 = vmul.f32 %v524, %v524
    %v532 = vsub.f32 %v530, %v531
    %v533 = vmax.f32 %v532, 0.0
    %v534 = vsub.f32 %v499, %v524
    %v535 = vsub.f32 %v519, %v524
    %v536 = vadd.f32 %v533, 1e-05
    %v537 = vrsqrt.pop %v536
    %v538 = vmul.f32 %v537, %v536
    %v539 = vmul.f32 %v538, %v537
    %v540 = vmul.f32 0.5, %v539
    %v541 = vsub.f32 1.5, %v540
    %v542 = vmul.f32 %v537, %v541
    %vm543 = vweird.f32 %v536
    %vm544 = vweird.f32 %v537
    %vm545 = vmor %vm543, %vm544
    %v546 = vsel %vm545, %v537, %v542
    %v547 = vmul.f32 %v534, %v546
    %v548 = vmul.f32 %v535, %v546
    %v549 = vmax.f32 %v547, 0.0
    %v550 = vmax.f32 %v548, 0.0
    %551 = vrot.lane.b32.xlu0 %v549, 17
    %v552 = vpop.permute.xlu0 %551
    %553 = vrot.lane.b32.xlu0 %v550, 17
    %v554 = vpop.permute.xlu0 %553
    %v555 = vsel %vm83, %v552, %v554
    %v556 = vsel %vm83, %v554, %v552
    %v557 = vmul.f32 %v556, %v87
    %v558 = vmul.f32 %v555, %v88
    %559 = vrot.lane.b32.xlu0 %v549, 16
    %v560 = vpop.permute.xlu0 %559
    %561 = vrot.lane.b32.xlu0 %v550, 16
    %v562 = vpop.permute.xlu0 %561
    %v563 = vsel %vm97, %v560, %v562
    %v564 = vsel %vm97, %v562, %v560
    %v565 = vmul.f32 %v564, %v101
    %v566 = vmul.f32 %v563, %v102
    %567 = vrot.lane.b32.xlu0 %v549, 15
    %v568 = vpop.permute.xlu0 %567
    %569 = vrot.lane.b32.xlu0 %v550, 15
    %v570 = vpop.permute.xlu0 %569
    %v571 = vsel %vm111, %v568, %v570
    %v572 = vsel %vm111, %v570, %v568
    %v573 = vmul.f32 %v572, %v115
    %v574 = vmul.f32 %v571, %v116
    %575 = vrot.lane.b32.xlu0 %v549, 1
    %v576 = vpop.permute.xlu0 %575
    %577 = vrot.lane.b32.xlu0 %v550, 1
    %v578 = vpop.permute.xlu0 %577
    %v579 = vsel %vm125, %v576, %v578
    %v580 = vsel %vm125, %v578, %v576
    %v581 = vmul.f32 %v580, %v129
    %v582 = vmul.f32 %v579, %v130
    %583 = vrot.lane.b32.xlu0 %v549, 127
    %v584 = vpop.permute.xlu0 %583
    %585 = vrot.lane.b32.xlu0 %v550, 127
    %v586 = vpop.permute.xlu0 %585
    %v587 = vsel %vm139, %v584, %v586
    %v588 = vsel %vm139, %v586, %v584
    %v589 = vmul.f32 %v587, %v143
    %v590 = vmul.f32 %v588, %v144
    %591 = vrot.lane.b32.xlu0 %v549, 113
    %v592 = vpop.permute.xlu0 %591
    %593 = vrot.lane.b32.xlu0 %v550, 113
    %v594 = vpop.permute.xlu0 %593
    %v595 = vsel %vm153, %v592, %v594
    %v596 = vsel %vm153, %v594, %v592
    %v597 = vmul.f32 %v595, %v157
    %v598 = vmul.f32 %v596, %v158
    %599 = vrot.lane.b32.xlu0 %v549, 112
    %v600 = vpop.permute.xlu0 %599
    %601 = vrot.lane.b32.xlu0 %v550, 112
    %v602 = vpop.permute.xlu0 %601
    %v603 = vsel %vm167, %v600, %v602
    %v604 = vsel %vm167, %v602, %v600
    %v605 = vmul.f32 %v603, %v171
    %v606 = vmul.f32 %v604, %v172
    %607 = vrot.lane.b32.xlu0 %v549, 111
    %v608 = vpop.permute.xlu0 %607
    %609 = vrot.lane.b32.xlu0 %v550, 111
    %v610 = vpop.permute.xlu0 %609
    %v611 = vsel %vm181, %v608, %v610
    %v612 = vsel %vm181, %v610, %v608
    %v613 = vmul.f32 %v611, %v185
    %v614 = vmul.f32 %v612, %v186
    %615 = vmatpush.msra.mxu0 0.0
    %616 = vmatpush.msra.mxu0 0.0
    %617 = vmatpush.msra.mxu0 0.0
    %618 = vmatpush.msra.mxu0 0.0
    %619 = vmatpush.msra.mxu0 0.0
    %620 = vmatpush.msra.mxu0 0.0
    %621 = vmatpush.msra.mxu0 0.0
    %622 = vmatpush.msra.mxu0 %v613
    %623 = vmatpush.msra.mxu0 %v605
    %624 = vmatpush.msra.mxu0 %v597
    %625 = vmatpush.msra.mxu0 %v589
    %626 = vmatpush.msra.mxu0 %v549
    %627 = vmatpush.msra.mxu0 %v581
    %628 = vmatpush.msra.mxu0 %v573
    %629 = vmatpush.msra.mxu0 %v565
    %630 = vmatpush.msra.mxu0 %v557
    %631 = vmatmul.f32.gmra.mxu0 %v340
    %v632 = vpop.f32.mrf.mxu0
    %v633 = vadd.f32 %v337, %v632
    %634 = vdwg.mxu0
    %635 = vmatpush.msra.mxu0 0.0
    %636 = vmatpush.msra.mxu0 0.0
    %637 = vmatpush.msra.mxu0 0.0
    %638 = vmatpush.msra.mxu0 0.0
    %639 = vmatpush.msra.mxu0 0.0
    %640 = vmatpush.msra.mxu0 0.0
    %641 = vmatpush.msra.mxu0 0.0
    %642 = vmatpush.msra.mxu0 %v614
    %643 = vmatpush.msra.mxu0 %v606
    %644 = vmatpush.msra.mxu0 %v598
    %645 = vmatpush.msra.mxu0 %v590
    %646 = vmatpush.msra.mxu0 %v550
    %647 = vmatpush.msra.mxu0 %v582
    %648 = vmatpush.msra.mxu0 %v574
    %649 = vmatpush.msra.mxu0 %v566
    %650 = vmatpush.msra.mxu0 %v558
    %651 = vmatmul.f32.gmra.mxu0 %v340
    %v652 = vpop.f32.mrf.mxu0
    %v653 = vadd.f32 %v337, %v652
    %654 = vdwg.mxu0
    %v655 = vadd.f32 %v633, %v653
    %656 = vadd.xlane.f32.xlu0 %v655
    %v657 = vpop.xlane.xlu0 %656
    %v658 = vmul.f32 %v657, 0.00390625
    %v659 = vmul.f32 %v633, %v633
    %v660 = vmul.f32 %v653, %v653
    %v661 = vadd.f32 %v659, %v660
    %662 = vadd.xlane.f32.xlu0 %v661
    %v663 = vpop.xlane.xlu0 %662
    %v664 = vmul.f32 %v663, 0.00390625
    %v665 = vmul.f32 %v658, %v658
    %v666 = vsub.f32 %v664, %v665
    %v667 = vmax.f32 %v666, 0.0
    %v668 = vsub.f32 %v633, %v658
    %v669 = vsub.f32 %v653, %v658
    %v670 = vadd.f32 %v667, 1e-05
    %v671 = vrsqrt.pop %v670
    %v672 = vmul.f32 %v671, %v670
    %v673 = vmul.f32 %v672, %v671
    %v674 = vmul.f32 0.5, %v673
    %v675 = vsub.f32 1.5, %v674
    %v676 = vmul.f32 %v671, %v675
    %vm677 = vweird.f32 %v670
    %vm678 = vweird.f32 %v671
    %vm679 = vmor %vm677, %vm678
    %v680 = vsel %vm679, %v671, %v676
    %v681 = vmul.f32 %v668, %v680
    %v682 = vmul.f32 %v669, %v680
    %v683 = vadd.f32 %v415, %v681
    %v684 = vadd.f32 %v416, %v682
    %s685 = scalar_lea.vmem [#allocation7], 16
    %686 = vst [vmem:[%s685] sm:$0xff] %v683
    %687 = vst [vmem:[%s685 + $0x8] sm:$0xff] %v684
    // Predicated region
    $region34: #{tpu_custom_call.1} parent=1 // pred_check
      _
    $region35: #{tpu_custom_call.1} parent=1 // pred_check_branch
      %689 = sbr.rel (0) target = $region37
    $region36: #{tpu_custom_call.1} parent=1 // pred_region
      %691 = vsyncadd [#allocation4], 0
      %s692 = sshll.u32 [#allocation7], 4
      %s693 = int_to_ptr.vmem [resolvable:$true] %s692
      %s694 = sshll.u32 %s6, 4
      %s695 = int_to_ptr.hbm [resolvable:$true] %s694
      %700 = dma.vmem_to_hbm [thread:$0]  %s693, 512, %s695, [#allocation4], 256, 256, 16
    $region37: #{tpu_custom_call.1} parent=1 // pred_fallthru
      _
    // Predicated region
    $region38: #{tpu_custom_call.1} parent=1 // pred_check
      _
    $region39: #{tpu_custom_call.1} parent=1 // pred_check_branch
      %702 = sbr.rel (0) target = $region41
    $region40: #{tpu_custom_call.1} parent=1 // pred_region
      %704 = dma.done [#allocation4], 512
    $region41: #{tpu_custom_call.1} parent=1 // pred_fallthru
      _
    %705 = vsyncpa [#allocation3], 1
    %706 = vsyncpa [#allocation6], 1
    %707 = vsyncpa [#allocation4], 1

</llo_original>
